<compile_context>
chip_gen: v7x
topology: tpu7x:2x2x1
jax: 0.10.0
libtpu: 0.0.40
codegen_flags: <defaults>
</compile_context>

<pallas_src>
import jax
import jax.numpy as jnp
from jax import lax
from jax.experimental import pallas as pl
from jax.experimental.pallas import tpu as pltpu

EPS = 1e-5
LANE = 128


def _round_up(x, m):
    return (x + m - 1) // m * m


# ---------- pass 1: per-channel sum / sum-of-squares of conv output ----------
def _stats_kernel(p_ref, w_ref, sum_ref, sq_ref):
    @pl.when(pl.program_id(0) == 0)
    def _init():
        sum_ref[...] = jnp.zeros_like(sum_ref)
        sq_ref[...] = jnp.zeros_like(sq_ref)

    acc = jnp.dot(p_ref[...], w_ref[...], preferred_element_type=jnp.float32)
    sum_ref[...] += jnp.sum(acc, axis=0, keepdims=True)
    sq_ref[...] += jnp.sum(acc * acc, axis=0, keepdims=True)


# ---------- pass 2: conv recompute + fused per-channel scale/shift -----------
def _apply_kernel(p_ref, w_ref, scale_ref, shift_ref, o_ref):
    acc = jnp.dot(p_ref[...], w_ref[...], preferred_element_type=jnp.float32)
    o_ref[...] = acc * scale_ref[...] + shift_ref[...]


def down_and_ex(x_nchw, weight, bias, gamma, beta, *, tm=512):
    """Forward of downAndEx. x_nchw: (N, Cin, H, W); weight: (Cout, Cin, 3, 3)."""
    # bias is accepted for nn.Conv2d interface parity but is mathematically
    # cancelled by the training-mode BatchNorm mean subtraction -> unused.
    del bias
    N, Cin, H, W = x_nchw.shape
    Cout = weight.shape[0]
    Ho = (H + 2 - 3) // 2 + 1
    Wo = (W + 2 - 3) // 2 + 1
    M = N * Ho * Wo
    K = Cin * 9

    # ---- glue: im2col in bf16 (layout plumbing only, no math) ----------------
    # TODO(synk): form the 9 shifted stride-2 patch views inside the kernel via
    # BlockSpec index maps over (n, ho) to avoid HBM-materializing this 2.25x
    # expanded patch matrix.
    x = jnp.transpose(x_nchw, (0, 2, 3, 1)).astype(jnp.bfloat16)      # NHWC
    xp = jnp.pad(x, ((0, 0), (1, 1), (1, 1), (0, 0)))
    cols = []
    for kh in range(3):
        for kw in range(3):
            cols.append(xp[:, kh:kh + 2 * Ho:2, kw:kw + 2 * Wo:2, :][:, :Ho, :Wo, :])
    # K ordered (cin, kh, kw) to match PyTorch weight.reshape(Cout, Cin*9)
    patches = jnp.stack(cols, axis=-1).reshape(M, K)

    # ---- pad to TPU-friendly shapes -------------------------------------------
    tm = min(tm, _round_up(M, 16))
    m_pad = _round_up(M, tm)
    k_pad = _round_up(K, LANE)
    c_pad = _round_up(Cout, LANE)

    patches = jnp.pad(patches, ((0, m_pad - M), (0, k_pad - K)))
    w2 = weight.reshape(Cout, K).T.astype(jnp.bfloat16)                # (K, Cout)
    w2 = jnp.pad(w2, ((0, k_pad - K), (0, c_pad - Cout)))
    gamma_p = jnp.pad(gamma.astype(jnp.float32), (0, c_pad - Cout),
                      constant_values=1.0)
    beta_p = jnp.pad(beta.astype(jnp.float32), (0, c_pad - Cout))

    grid = (m_pad // tm,)
    p_spec = pl.BlockSpec((tm, k_pad), lambda i: (i, 0))
    w_spec = pl.BlockSpec((k_pad, c_pad), lambda i: (0, 0))
    vec_spec = pl.BlockSpec((1, c_pad), lambda i: (0, 0))
    vmem_limit = 32 * 1024 * 1024   # fits v7x's 64 MiB physical VMEM comfortably

    # ---- pass 1: streaming per-channel sum / sumsq (resident accumulators) ----
    sums, sqs = pl.pallas_call(
        _stats_kernel,
        grid=grid,
        in_specs=[p_spec, w_spec],
        out_specs=[vec_spec, vec_spec],
        out_shape=[jax.ShapeDtypeStruct((1, c_pad), jnp.float32)] * 2,
        compiler_params=pltpu.CompilerParams(
            dimension_semantics=("arbitrary",),
            vmem_limit_bytes=vmem_limit),
    )(patches, w2)

    # ---- fold BN into two per-channel constants (tiny, plain JAX) -------------
    mean = sums[0] / M
    var = jnp.maximum(sqs[0] / M - mean * mean, 0.0)
    scale = gamma_p * lax.rsqrt(var + EPS)
    shift = beta_p - mean * scale

    # ---- pass 2: recompute conv tile, single FMA epilogue, lane-dense output --
    out = pl.pallas_call(
        _apply_kernel,
        grid=grid,
        in_specs=[p_spec, w_spec, vec_spec, vec_spec],
        out_specs=pl.BlockSpec((tm, c_pad), lambda i: (i, 0)),
        out_shape=jax.ShapeDtypeStruct((m_pad, c_pad), jnp.float32),
        compiler_params=pltpu.CompilerParams(
            dimension_semantics=("parallel",),
            vmem_limit_bytes=vmem_limit),
    )(patches, w2, scale.reshape(1, c_pad), shift.reshape(1, c_pad))

    out = out[:M, :Cout].reshape(N, Ho, Wo, Cout)
    # TODO(synk): consumers that accept NHWC can skip this final transpose.
    return jnp.transpose(out, (0, 3, 1, 2))                            # NCHW


def _reference(x, weight, bias, gamma, beta):
    # Same bf16-rounded inputs / f32 accumulation as the kernel's MXU path.
    conv = lax.conv_general_dilated(
        x.astype(jnp.bfloat16), weight.astype(jnp.bfloat16),
        window_strides=(2, 2), padding=((1, 1), (1, 1)),
        dimension_numbers=("NCHW", "OIHW", "NCHW"),
        preferred_element_type=jnp.float32)
    conv = conv + bias.reshape(1, -1, 1, 1)      # cancelled by BN; kept to prove it
    mean = conv.mean(axis=(0, 2, 3), keepdims=True)
    var = ((conv - mean) ** 2).mean(axis=(0, 2, 3), keepdims=True)
    return (conv - mean) * lax.rsqrt(var + EPS) * gamma.reshape(1, -1, 1, 1) \
        + beta.reshape(1, -1, 1, 1)


if __name__ == "__main__":
    N, Cin, H, W = 2, 4, 16, 16
    Cout = 8

    key = jax.random.PRNGKey(0)
    kx, kw, kb, kg, kbeta = jax.random.split(key, 5)

    x = jax.random.normal(kx, (N, Cin, H, W), dtype=jnp.float32)
    fan_in = Cin * 3 * 3
    bound = 1.0 / (fan_in ** 0.5)
    weight = jax.random.uniform(kw, (Cout, Cin, 3, 3), jnp.float32, -bound, bound)
    bias = jax.random.uniform(kb, (Cout,), jnp.float32, -bound, bound)
    gamma = 1.0 + 0.1 * jax.random.normal(kg, (Cout,), dtype=jnp.float32)
    beta = 0.1 * jax.random.normal(kbeta, (Cout,), dtype=jnp.float32)

    out = down_and_ex(x, weight, bias, gamma, beta)
    out = jax.block_until_ready(out)

    ref = _reference(x, weight, bias, gamma, beta)
    assert out.shape == (N, Cout, H // 2, W // 2)
    assert jnp.allclose(out, ref, atol=1e-3, rtol=1e-3), "mismatch vs JAX reference"

    print("KERNEL_OK")
</pallas_src>

<mosaic_0001>
module attributes {stable_mosaic.version = 11 : i64} {
  func.func @_stats_kernel(%arg0: i32, %arg1: memref<128x128xbf16, #tpu.memory_space<vmem>>, %arg2: memref<128x128xbf16, #tpu.memory_space<vmem>>, %arg3: memref<1x128xf32, #tpu.memory_space<vmem>>, %arg4: memref<1x128xf32, #tpu.memory_space<vmem>>) attributes {dimension_semantics = [#tpu.dimension_semantics<arbitrary>], iteration_bounds = array<i64: 1>, scalar_prefetch = 0 : i64, scratch_operands = 0 : i64, tpu.core_type = #tpu.core_type<tc>, window_params = [{transform_indices = @transform_0, window_bounds = array<i64: 128, 128>}, {pipeline_mode = #tpu.pipeline_mode<synchronous>, transform_indices = @transform_1, window_bounds = array<i64: 128, 128>}, {pipeline_mode = #tpu.pipeline_mode<synchronous>, transform_indices = @transform_2, window_bounds = array<i64: 1, 128>}, {pipeline_mode = #tpu.pipeline_mode<synchronous>, transform_indices = @transform_3, window_bounds = array<i64: 1, 128>}]} {
    %c0_i32 = arith.constant 0 : i32
    %0 = arith.cmpi eq, %arg0, %c0_i32 : i32
    %1 = arith.extui %0 : i1 to i32
    %c0_i32_0 = arith.constant 0 : i32
    %2 = arith.cmpi ne, %1, %c0_i32_0 : i32
    scf.if %2 {
      %cst_14 = arith.constant 0.000000e+00 : f32
      %17 = vector.broadcast %cst_14 : f32 to vector<1x128xf32>
      %c0_15 = arith.constant 0 : index
      %c0_16 = arith.constant 0 : index
      %18 = vector.load %arg3[%c0_15, %c0_16] : memref<1x128xf32, #tpu.memory_space<vmem>>, vector<1x128xf32>
      tpu.vector_store %arg3[%c0_15, %c0_16], %17 {strides = array<i32>} : memref<1x128xf32, #tpu.memory_space<vmem>>, vector<1x128xf32>,
      %cst_17 = arith.constant 0.000000e+00 : f32
      %19 = vector.broadcast %cst_17 : f32 to vector<1x128xf32>
      %c0_18 = arith.constant 0 : index
      %c0_19 = arith.constant 0 : index
      %20 = vector.load %arg4[%c0_18, %c0_19] : memref<1x128xf32, #tpu.memory_space<vmem>>, vector<1x128xf32>
      tpu.vector_store %arg4[%c0_18, %c0_19], %19 {strides = array<i32>} : memref<1x128xf32, #tpu.memory_space<vmem>>, vector<1x128xf32>,
    } else {
    }
    %c0 = arith.constant 0 : index
    %c0_1 = arith.constant 0 : index
    %3 = vector.load %arg1[%c0, %c0_1] : memref<128x128xbf16, #tpu.memory_space<vmem>>, vector<128x128xbf16>
    %c0_2 = arith.constant 0 : index
    %c0_3 = arith.constant 0 : index
    %4 = vector.load %arg2[%c0_2, %c0_3] : memref<128x128xbf16, #tpu.memory_space<vmem>>, vector<128x128xbf16>
    %cst = arith.constant dense<0.000000e+00> : vector<128x128xf32>
    %5 = tpu.matmul %3, %4, %cst {dimension_numbers = #tpu.dot_dimension_numbers<[1], [0], [0], [1], [0, 0, 1, 1], [], []>} : vector<128x128xbf16>, vector<128x128xbf16>, vector<128x128xf32> -> vector<128x128xf32>
    %c0_4 = arith.constant 0 : index
    %c0_5 = arith.constant 0 : index
    %6 = vector.load %arg3[%c0_4, %c0_5] : memref<1x128xf32, #tpu.memory_space<vmem>>, vector<1x128xf32>
    %cst_6 = arith.constant dense<0.000000e+00> : vector<128xf32>
    %7 = vector.multi_reduction <add>, %5, %cst_6 [0] : vector<128x128xf32> to vector<128xf32>
    %8 = vector.shape_cast %7 : vector<128xf32> to vector<1x128xf32>
    %9 = arith.addf %6, %8 : vector<1x128xf32>
    %c0_7 = arith.constant 0 : index
    %c0_8 = arith.constant 0 : index
    %10 = vector.load %arg3[%c0_7, %c0_8] : memref<1x128xf32, #tpu.memory_space<vmem>>, vector<1x128xf32>
    tpu.vector_store %arg3[%c0_7, %c0_8], %9 {strides = array<i32>} : memref<1x128xf32, #tpu.memory_space<vmem>>, vector<1x128xf32>,
    %c0_9 = arith.constant 0 : index
    %c0_10 = arith.constant 0 : index
    %11 = vector.load %arg4[%c0_9, %c0_10] : memref<1x128xf32, #tpu.memory_space<vmem>>, vector<1x128xf32>
    %12 = arith.mulf %5, %5 : vector<128x128xf32>
    %cst_11 = arith.constant dense<0.000000e+00> : vector<128xf32>
    %13 = vector.multi_reduction <add>, %12, %cst_11 [0] : vector<128x128xf32> to vector<128xf32>
    %14 = vector.shape_cast %13 : vector<128xf32> to vector<1x128xf32>
    %15 = arith.addf %11, %14 : vector<1x128xf32>
    %c0_12 = arith.constant 0 : index
    %c0_13 = arith.constant 0 : index
    %16 = vector.load %arg4[%c0_12, %c0_13] : memref<1x128xf32, #tpu.memory_space<vmem>>, vector<1x128xf32>
    tpu.vector_store %arg4[%c0_12, %c0_13], %15 {strides = array<i32>} : memref<1x128xf32, #tpu.memory_space<vmem>>, vector<1x128xf32>,
    return
  }
  func.func @transform_0(%arg0: i32) -> (i32, i32) {
    %c0_i32 = arith.constant 0 : i32
    %c0_i32_0 = arith.constant 0 : i32
    return %arg0, %c0_i32 : i32, i32
  }
  func.func @transform_1(%arg0: i32) -> (i32, i32) {
    %c0_i32 = arith.constant 0 : i32
    %c0_i32_0 = arith.constant 0 : i32
    %c0_i32_1 = arith.constant 0 : i32
    return %c0_i32, %c0_i32_0 : i32, i32
  }
  func.func @transform_2(%arg0: i32) -> (i32, i32) {
    %c0_i32 = arith.constant 0 : i32
    %c0_i32_0 = arith.constant 0 : i32
    %c0_i32_1 = arith.constant 0 : i32
    return %c0_i32, %c0_i32_0 : i32, i32
  }
  func.func @transform_3(%arg0: i32) -> (i32, i32) {
    %c0_i32 = arith.constant 0 : i32
    %c0_i32_0 = arith.constant 0 : i32
    %c0_i32_1 = arith.constant 0 : i32
    return %c0_i32, %c0_i32_0 : i32, i32
  }
}

</mosaic_0001>

<llo_original>
// kernel: tpu_custom_call.1
$region0: #{tpu_custom_call.1}
  #allocation0 [shape = 'u32[]', space=smem, size = 0x4, offset = 0x4, fixed_abs, tag = 'smem constant byte address 0x4 - core index']
  #allocation1 [shape = 'u32[144,128]{1,0:T(1,128)}', space=vmem, size = 0x12000, scoped, tag = 'internal scratch']
  %s0 = inlined_call_operand.hbm [shape: bf16[128,128], index: 0, kind: input, shape index: {}]
  %s1 = inlined_call_operand.hbm [shape: bf16[128,128], index: 1, kind: input, shape index: {}]
  %s2 = inlined_call_operand.hbm [shape: f32[1,128], index: 2, kind: output, shape index: {0}]
  %s3 = inlined_call_operand.hbm [shape: f32[1,128], index: 3, kind: output, shape index: {1}]
  %4 = xla_tuple %s2, %s3
  %s5 = sld [smem:[#allocation0]]
  $region38: #{tpu_custom_call.1} parent=0
    _
  %s7 = ssub.s32 1, %s5
  %s8 = scalar_select 0, %s7, %s5
  $region1: #{tpu_custom_call.1} parent=0
    #allocation2 [shape = 'u8[32768]{0}', space=vmem, size = 0x8000, scoped, tag = 'input window, operand 0, single buffered']
    #allocation3 [shape = 's32[1]{0}', space=sflag, size = 0x4, scoped, tag = 'scoped memory for tpu_custom_call.1']
    #allocation4 [shape = 's32[1]{0}', space=sflag, size = 0x4, scoped, tag = 'scoped memory for tpu_custom_call.1']
    #allocation5 [shape = 'u8[32768]{0}', space=vmem, size = 0x8000, scoped, tag = 'input window, operand 1, single buffered']
    #allocation6 [shape = 's32[1]{0}', space=sflag, size = 0x4, scoped, tag = 'scoped memory for tpu_custom_call.1']
    #allocation7 [shape = 'u8[512]{0}', space=vmem, size = 0x400, scoped, tag = 'output window, operand 0, single buffered']
    #allocation8 [shape = 'u8[512]{0}', space=vmem, size = 0x400, scoped, tag = 'output window, operand 1, single buffered']
    #allocation9 [shape = 's32[1]{0}', space=sflag, size = 0x4, scoped, tag = 'scoped memory for tpu_custom_call.1']
    %9 = vsyncpa [#allocation3], 0
    %10 = vsyncpa [#allocation6], 0
    %11 = vsyncpa [#allocation4], 0
    %12 = vsyncpa [#allocation9], 0
    // Predicated region
    $region2: #{tpu_custom_call.1} parent=1 // pred_check
      _
    $region3: #{tpu_custom_call.1} parent=1 // pred_check_branch
      %14 = sbr.rel (0) target = $region5
    $region4: #{tpu_custom_call.1} parent=1 // pred_region
      %s16 = ssub.s32 1024, 1024
      %17 = vsyncadd [#allocation3], %s16
      %s18 = sshll.u32 [#allocation2], 4
      %s19 = int_to_ptr.vmem [resolvable:$true] %s18
      %24 = dma.hbm_to_vmem [thread:$0]  %s0, 1024, %s19, [#allocation3], 64, 64, 4
    $region5: #{tpu_custom_call.1} parent=1 // pred_fallthru
      _
    // Predicated region
    $region6: #{tpu_custom_call.1} parent=1 // pred_check
      _
    $region7: #{tpu_custom_call.1} parent=1 // pred_check_branch
      %26 = sbr.rel (0) target = $region9
    $region8: #{tpu_custom_call.1} parent=1 // pred_region
      %s28 = ssub.s32 1024, 1024
      %29 = vsyncadd [#allocation6], %s28
      %s30 = sshll.u32 [#allocation5], 4
      %s31 = int_to_ptr.vmem [resolvable:$true] %s30
      %36 = dma.hbm_to_vmem [thread:$0]  %s1, 1024, %s31, [#allocation6], 64, 64, 4
    $region9: #{tpu_custom_call.1} parent=1 // pred_fallthru
      _
    // Predicated region
    $region10: #{tpu_custom_call.1} parent=1 // pred_check
      _
    $region11: #{tpu_custom_call.1} parent=1 // pred_check_branch
      %38 = sbr.rel (0) target = $region13
    $region12: #{tpu_custom_call.1} parent=1 // pred_region
      %39 = dma.done [#allocation3], 1024
    $region13: #{tpu_custom_call.1} parent=1 // pred_fallthru
      _
    // Predicated region
    $region14: #{tpu_custom_call.1} parent=1 // pred_check
      _
    $region15: #{tpu_custom_call.1} parent=1 // pred_check_branch
      %41 = sbr.rel (0) target = $region17
    $region16: #{tpu_custom_call.1} parent=1 // pred_region
      %42 = dma.done [#allocation6], 1024
    $region17: #{tpu_custom_call.1} parent=1 // pred_fallthru
      _
    %p44 = scmp.eq.s32.totalorder 0, 0
    // Predicated region
    $region18: #{tpu_custom_call.1} parent=1 // pred_check
      %p45 = pneg %p44
    $region19: #{tpu_custom_call.1} parent=1 // pred_check_branch
      %47 = sbr.rel (%p45) target = $region21
    $region20: #{tpu_custom_call.1} parent=1 // pred_region
      %48 = vst [vmem:[#allocation7] sm:$0x1] 0.0
      %49 = vst [vmem:[#allocation8] sm:$0x1] 0.0
    $region21: #{tpu_custom_call.1} parent=1 // pred_fallthru
      _
    %v50 = vld [vmem:[#allocation2] sm:$0xf]
    %v51 = vld [vmem:[#allocation2 + $0x4] sm:$0xf]
    %v52 = vld [vmem:[#allocation2 + $0x8] sm:$0xf]
    %v53 = vld [vmem:[#allocation2 + $0xc] sm:$0xf]
    %v54 = vld [vmem:[#allocation2 + $0x10] sm:$0xf]
    %v55 = vld [vmem:[#allocation2 + $0x14] sm:$0xf]
    %v56 = vld [vmem:[#allocation2 + $0x18] sm:$0xf]
    %v57 = vld [vmem:[#allocation2 + $0x1c] sm:$0xf]
    %v58 = vld [vmem:[#allocation2 + $0x20] sm:$0xf]
    %v59 = vld [vmem:[#allocation2 + $0x24] sm:$0xf]
    %v60 = vld [vmem:[#allocation2 + $0x28] sm:$0xf]
    %v61 = vld [vmem:[#allocation2 + $0x2c] sm:$0xf]
    %v62 = vld [vmem:[#allocation2 + $0x30] sm:$0xf]
    %v63 = vld [vmem:[#allocation2 + $0x34] sm:$0xf]
    %v64 = vld [vmem:[#allocation2 + $0x38] sm:$0xf]
    %v65 = vld [vmem:[#allocation2 + $0x3c] sm:$0xf]
    %v66 = vld [vmem:[#allocation5] sm:$0xf]
    %v67 = vld [vmem:[#allocation5 + $0x4] sm:$0xf]
    %v68 = vld [vmem:[#allocation5 + $0x8] sm:$0xf]
    %v69 = vld [vmem:[#allocation5 + $0xc] sm:$0xf]
    %v70 = vld [vmem:[#allocation5 + $0x10] sm:$0xf]
    %v71 = vld [vmem:[#allocation5 + $0x14] sm:$0xf]
    %v72 = vld [vmem:[#allocation5 + $0x18] sm:$0xf]
    %v73 = vld [vmem:[#allocation5 + $0x1c] sm:$0xf]
    %v74 = vld [vmem:[#allocation5 + $0x20] sm:$0xf]
    %v75 = vld [vmem:[#allocation5 + $0x24] sm:$0xf]
    %v76 = vld [vmem:[#allocation5 + $0x28] sm:$0xf]
    %v77 = vld [vmem:[#allocation5 + $0x2c] sm:$0xf]
    %v78 = vld [vmem:[#allocation5 + $0x30] sm:$0xf]
    %v79 = vld [vmem:[#allocation5 + $0x34] sm:$0xf]
    %v80 = vld [vmem:[#allocation5 + $0x38] sm:$0xf]
    %v81 = vld [vmem:[#allocation5 + $0x3c] sm:$0xf]
    %v98 = vunpack.c.l.b16 %v50
    %v99 = vunpack.c.l.b16 %v51
    %v100 = vunpack.c.l.b16 %v52
    %v101 = vunpack.c.l.b16 %v53
    %v102 = vunpack.c.l.b16 %v54
    %v103 = vunpack.c.l.b16 %v55
    %v104 = vunpack.c.l.b16 %v56
    %v105 = vunpack.c.l.b16 %v57
    %v106 = vunpack.c.l.b16 %v58
    %v107 = vunpack.c.l.b16 %v59
    %v108 = vunpack.c.l.b16 %v60
    %v109 = vunpack.c.l.b16 %v61
    %v110 = vunpack.c.l.b16 %v62
    %v111 = vunpack.c.l.b16 %v63
    %v112 = vunpack.c.l.b16 %v64
    %v113 = vunpack.c.l.b16 %v65
    %v114 = vpack.c.b16 %v99, %v98
    %v115 = vpack.c.b16 %v101, %v100
    %v116 = vpack.c.b16 %v103, %v102
    %v117 = vpack.c.b16 %v105, %v104
    %v118 = vpack.c.b16 %v107, %v106
    %v119 = vpack.c.b16 %v109, %v108
    %v120 = vpack.c.b16 %v111, %v110
    %v121 = vpack.c.b16 %v113, %v112
    %v146 = vunpack.c.l.b16 %v66
    %v147 = vunpack.c.l.b16 %v67
    %v148 = vunpack.c.l.b16 %v68
    %v149 = vunpack.c.l.b16 %v69
    %v150 = vunpack.c.l.b16 %v70
    %v151 = vunpack.c.l.b16 %v71
    %v152 = vunpack.c.l.b16 %v72
    %v153 = vunpack.c.l.b16 %v73
    %v154 = vunpack.c.l.b16 %v74
    %v155 = vunpack.c.l.b16 %v75
    %v156 = vunpack.c.l.b16 %v76
    %v157 = vunpack.c.l.b16 %v77
    %v158 = vunpack.c.l.b16 %v78
    %v159 = vunpack.c.l.b16 %v79
    %v160 = vunpack.c.l.b16 %v80
    %v161 = vunpack.c.l.b16 %v81
    %v162 = vpack.c.b16 %v147, %v146
    %v163 = vpack.c.b16 %v149, %v148
    %v164 = vpack.c.b16 %v151, %v150
    %v165 = vpack.c.b16 %v153, %v152
    %v166 = vpack.c.b16 %v155, %v154
    %v167 = vpack.c.b16 %v157, %v156
    %v168 = vpack.c.b16 %v159, %v158
    %v169 = vpack.c.b16 %v161, %v160
    %178 = vmatprep.subr.bf16.mxu0 0
    %179 = vmatpush1.bf16.msra.mxu0 %v162
    %180 = vmatprep.subr.bf16.mxu0 0
    %181 = vmatpush1.bf16.msra.mxu0 %v163
    %182 = vmatprep.subr.bf16.mxu0 0
    %183 = vmatpush1.bf16.msra.mxu0 %v164
    %184 = vmatprep.subr.bf16.mxu0 0
    %185 = vmatpush1.bf16.msra.mxu0 %v165
    %186 = vmatprep.subr.bf16.mxu0 0
    %187 = vmatpush1.bf16.msra.mxu0 %v166
    %188 = vmatprep.subr.bf16.mxu0 0
    %189 = vmatpush1.bf16.msra.mxu0 %v167
    %190 = vmatprep.subr.bf16.mxu0 0
    %191 = vmatpush1.bf16.msra.mxu0 %v168
    %192 = vmatprep.subr.bf16.mxu0 0
    %193 = vmatpush1.bf16.msra.mxu0 %v169
    %194 = vmatprep.subr.bf16.mxu0 0
    %195 = vmatpush1.bf16.msra.mxu0 0
    %196 = vmatprep.subr.bf16.mxu0 0
    %197 = vmatpush1.bf16.msra.mxu0 0
    %198 = vmatprep.subr.bf16.mxu0 0
    %199 = vmatpush1.bf16.msra.mxu0 0
    %200 = vmatprep.subr.bf16.mxu0 0
    %201 = vmatpush1.bf16.msra.mxu0 0
    %202 = vmatprep.subr.bf16.mxu0 0
    %203 = vmatpush1.bf16.msra.mxu0 0
    %204 = vmatprep.subr.bf16.mxu0 0
    %205 = vmatpush1.bf16.msra.mxu0 0
    %206 = vmatprep.subr.bf16.mxu0 0
    %207 = vmatpush1.bf16.msra.mxu0 0
    %208 = vmatprep.subr.bf16.mxu0 0
    %209 = vmatpush1.bf16.msra.mxu0 0
    %210 = vmatprep.mubr.bf16.mxu0 0
    %211 = vmatmul.mubr.bf16.gmra.mrb[0].mxu0 %v114
    %v212 = vpop.f32.mrb[0].mxu0
    %v213 = vadd.f32 0.0, %v212
    %v214 = vpop.f32.mrb[0].mxu0
    %v215 = vpop.f32.mrb[0].mxu0
    %v216 = vadd.f32 0.0, %v215
    %v217 = vpop.f32.mrb[0].mxu0
    %218 = vmatprep.mubr.bf16.mxu0 0
    %219 = vmatmul.mubr.bf16.gmra.mrb[0].mxu0 %v115
    %v220 = vpop.f32.mrb[0].mxu0
    %v221 = vadd.f32 0.0, %v220
    %v222 = vpop.f32.mrb[0].mxu0
    %v223 = vpop.f32.mrb[0].mxu0
    %v224 = vadd.f32 0.0, %v223
    %v225 = vpop.f32.mrb[0].mxu0
    %226 = vmatprep.mubr.bf16.mxu0 0
    %227 = vmatmul.mubr.bf16.gmra.mrb[0].mxu0 %v116
    %v228 = vpop.f32.mrb[0].mxu0
    %v229 = vadd.f32 0.0, %v228
    %v230 = vpop.f32.mrb[0].mxu0
    %v231 = vpop.f32.mrb[0].mxu0
    %v232 = vadd.f32 0.0, %v231
    %v233 = vpop.f32.mrb[0].mxu0
    %234 = vmatprep.mubr.bf16.mxu0 0
    %235 = vmatmul.mubr.bf16.gmra.mrb[0].mxu0 %v117
    %v236 = vpop.f32.mrb[0].mxu0
    %v237 = vadd.f32 0.0, %v236
    %v238 = vpop.f32.mrb[0].mxu0
    %v239 = vpop.f32.mrb[0].mxu0
    %v240 = vadd.f32 0.0, %v239
    %v241 = vpop.f32.mrb[0].mxu0
    %242 = vmatprep.mubr.bf16.mxu0 0
    %243 = vmatmul.mubr.bf16.gmra.mrb[0].mxu0 %v118
    %v244 = vpop.f32.mrb[0].mxu0
    %v245 = vadd.f32 0.0, %v244
    %v246 = vpop.f32.mrb[0].mxu0
    %v247 = vpop.f32.mrb[0].mxu0
    %v248 = vadd.f32 0.0, %v247
    %v249 = vpop.f32.mrb[0].mxu0
    %250 = vmatprep.mubr.bf16.mxu0 0
    %251 = vmatmul.mubr.bf16.gmra.mrb[0].mxu0 %v119
    %v252 = vpop.f32.mrb[0].mxu0
    %v253 = vadd.f32 0.0, %v252
    %v254 = vpop.f32.mrb[0].mxu0
    %v255 = vpop.f32.mrb[0].mxu0
    %v256 = vadd.f32 0.0, %v255
    %v257 = vpop.f32.mrb[0].mxu0
    %258 = vmatprep.mubr.bf16.mxu0 0
    %259 = vmatmul.mubr.bf16.gmra.mrb[0].mxu0 %v120
    %v260 = vpop.f32.mrb[0].mxu0
    %v261 = vadd.f32 0.0, %v260
    %v262 = vpop.f32.mrb[0].mxu0
    %v263 = vpop.f32.mrb[0].mxu0
    %v264 = vadd.f32 0.0, %v263
    %v265 = vpop.f32.mrb[0].mxu0
    %266 = vmatprep.mubr.bf16.mxu0 0
    %267 = vmatmul.mubr.bf16.gmra.mrb[0].mxu0 %v121
    %v268 = vpop.f32.mrb[0].mxu0
    %v269 = vadd.f32 0.0, %v268
    %v270 = vpop.f32.mrb[0].mxu0
    %v271 = vpop.f32.mrb[0].mxu0
    %v272 = vadd.f32 0.0, %v271
    %v273 = vpop.f32.mrb[0].mxu0
    %274 = vdwg.mxu0
    %v275 = vld [vmem:[#allocation7] sm:$0x1]
    %v276 = vadd.f32 %v213, %v216
    %v277 = vadd.f32 %v276, %v221
    %v278 = vadd.f32 %v277, %v224
    %v279 = vadd.f32 %v278, %v229
    %v280 = vadd.f32 %v279, %v232
    %v281 = vadd.f32 %v280, %v237
    %v282 = vadd.f32 %v281, %v240
    %v283 = vadd.f32 %v282, %v245
    %v284 = vadd.f32 %v283, %v248
    %v285 = vadd.f32 %v284, %v253
    %v286 = vadd.f32 %v285, %v256
    %v287 = vadd.f32 %v286, %v261
    %v288 = vadd.f32 %v287, %v264
    %v289 = vadd.f32 %v288, %v269
    %v290 = vadd.f32 %v289, %v272
    %v291 = vrot.slane %v290, 4
    %v292 = vadd.f32 %v290, %v291
    %v293 = vrot.slane %v292, 2
    %v294 = vadd.f32 %v292, %v293
    %v295 = vrot.slane %v294, 1
    %v296 = vadd.f32 %v294, %v295
    %v297 = vadd.f32 %v275, %v296
    %298 = vst [vmem:[#allocation7] sm:$0x1] %v297
    %v299 = vld [vmem:[#allocation8] sm:$0x1]
    %v300 = vmul.f32 %v213, %v213
    %v301 = vmul.f32 %v216, %v216
    %v302 = vmul.f32 %v221, %v221
    %v303 = vmul.f32 %v224, %v224
    %v304 = vmul.f32 %v229, %v229
    %v305 = vmul.f32 %v232, %v232
    %v306 = vmul.f32 %v237, %v237
    %v307 = vmul.f32 %v240, %v240
    %v308 = vmul.f32 %v245, %v245
    %v309 = vmul.f32 %v248, %v248
    %v310 = vmul.f32 %v253, %v253
    %v311 = vmul.f32 %v256, %v256
    %v312 = vmul.f32 %v261, %v261
    %v313 = vmul.f32 %v264, %v264
    %v314 = vmul.f32 %v269, %v269
    %v315 = vmul.f32 %v272, %v272
    %v316 = vadd.f32 %v300, %v301
    %v317 = vadd.f32 %v316, %v302
    %v318 = vadd.f32 %v317, %v303
    %v319 = vadd.f32 %v318, %v304
    %v320 = vadd.f32 %v319, %v305
    %v321 = vadd.f32 %v320, %v306
    %v322 = vadd.f32 %v321, %v307
    %v323 = vadd.f32 %v322, %v308
    %v324 = vadd.f32 %v323, %v309
    %v325 = vadd.f32 %v324, %v310
    %v326 = vadd.f32 %v325, %v311
    %v327 = vadd.f32 %v326, %v312
    %v328 = vadd.f32 %v327, %v313
    %v329 = vadd.f32 %v328, %v314
    %v330 = vadd.f32 %v329, %v315
    %v331 = vrot.slane %v330, 4
    %v332 = vadd.f32 %v330, %v331
    %v333 = vrot.slane %v332, 2
    %v334 = vadd.f32 %v332, %v333
    %v335 = vrot.slane %v334, 1
    %v336 = vadd.f32 %v334, %v335
    %v337 = vadd.f32 %v299, %v336
    %338 = vst [vmem:[#allocation8] sm:$0x1] %v337
    // Predicated region
    $region22: #{tpu_custom_call.1} parent=1 // pred_check
      _
    $region23: #{tpu_custom_call.1} parent=1 // pred_check_branch
      %340 = sbr.rel (0) target = $region25
    $region24: #{tpu_custom_call.1} parent=1 // pred_region
      %s342 = ssub.s32 16, 16
      %343 = vsyncadd [#allocation4], %s342
      %s345 = sshll.u32 [#allocation7], 4
      %s346 = int_to_ptr.vmem [resolvable:$true] %s345
      %348 = dma.vmem_to_hbm [thread:$0]  %s346, 16, %s2, [#allocation4]
    $region25: #{tpu_custom_call.1} parent=1 // pred_fallthru
      _
    // Predicated region
    $region26: #{tpu_custom_call.1} parent=1 // pred_check
      _
    $region27: #{tpu_custom_call.1} parent=1 // pred_check_branch
      %350 = sbr.rel (0) target = $region29
    $region28: #{tpu_custom_call.1} parent=1 // pred_region
      %s352 = ssub.s32 16, 16
      %353 = vsyncadd [#allocation9], %s352
      %s355 = sshll.u32 [#allocation8], 4
      %s356 = int_to_ptr.vmem [resolvable:$true] %s355
      %358 = dma.vmem_to_hbm [thread:$0]  %s356, 16, %s3, [#allocation9]
    $region29: #{tpu_custom_call.1} parent=1 // pred_fallthru
      _
    // Predicated region
    $region30: #{tpu_custom_call.1} parent=1 // pred_check
      _
    $region31: #{tpu_custom_call.1} parent=1 // pred_check_branch
      %360 = sbr.rel (0) target = $region33
    $region32: #{tpu_custom_call.1} parent=1 // pred_region
      %361 = dma.done [#allocation4], 16
    $region33: #{tpu_custom_call.1} parent=1 // pred_fallthru
      _
    // Predicated region
    $region34: #{tpu_custom_call.1} parent=1 // pred_check
      _
    $region35: #{tpu_custom_call.1} parent=1 // pred_check_branch
      %363 = sbr.rel (0) target = $region37
    $region36: #{tpu_custom_call.1} parent=1 // pred_region
      %364 = dma.done [#allocation9], 16
    $region37: #{tpu_custom_call.1} parent=1 // pred_fallthru
      _
    %365 = vsyncpa [#allocation3], 1
    %366 = vsyncpa [#allocation6], 1
    %367 = vsyncpa [#allocation4], 1
    %368 = vsyncpa [#allocation9], 1

</llo_original>
